<compile_context>
chip_gen: v7x
topology: tpu7x:2x2x1
jax: 0.10.0
libtpu: 0.0.40
codegen_flags: <defaults>
</compile_context>

<pallas_src>
import numpy as np
import jax
import jax.numpy as jnp
from jax.experimental import pallas as pl
from jax.experimental.pallas import tpu as pltpu

SEQ = 16          # T (sequence length)
BATCH = 2         # B
DIM = 32          # C (model_dim = cfg.encoder.embed_dim)
KSIZE = 31        # cfg.encoder.depthwise_conv_kernel_size
PAD = (KSIZE - 1) // 2
LN_EPS = 1e-5
BN_EPS = 1e-5

ROWS = SEQ * BATCH                              # R = T*B, row r = t*B + b
_LPAD = -(-(PAD * BATCH) // 8) * 8              # zero pad rows (>= PAD*B, mult of 8) -> 32
_KPAD = -(-KSIZE // 8) * 8                      # depthwise weight rows padded to mult of 8
_PADDED_ROWS = ROWS + 2 * _LPAD                 # scratch rows for "same" padding


def conformer_conv_kernel(x_ref, vec_ref, w1_ref, w2_ref, wd_ref, o_ref, pad_ref):
    # x_ref: (R, C) with R = T*B and row r = t*B + b (row-major view of (T,B,C)).
    x = x_ref[...].astype(jnp.float32)                       # (R, C)
    R, C = x.shape

    vecs = vec_ref[...]                                      # (8, 2C) packed vectors
    b1 = vecs[0:1, :]                                        # (1, 2C) fused conv1 bias (LN beta folded in)
    bn_shift = vecs[1:2, :C]                                 # (1, C)  BatchNorm shift (eval, folded)
    b2 = vecs[1:2, C:]                                       # (1, C)  pointwise conv2 bias

    # ---- LayerNorm over channels (affine gamma/beta folded into w1/b1) ----
    mean = jnp.mean(x, axis=-1, keepdims=True)
    xc = x - mean
    var = jnp.mean(xc * xc, axis=-1, keepdims=True)
    xhat = xc * jax.lax.rsqrt(var + LN_EPS)                  # (R, C)

    # ---- pointwise conv1 (value||gate fused into one matmul) + GLU ----
    ag = jnp.dot(xhat, w1_ref[...], preferred_element_type=jnp.float32) + b1   # (R, 2C)
    y = ag[:, :C] * jax.nn.sigmoid(ag[:, C:])                # (R, C)

    # ---- depthwise conv along time ("same" padding): K tap MACs ----
    # Write y into the middle of a zero-padded scratch slab, then accumulate
    # acc += wd_scaled[k] * pad[off_k : off_k + R] where off_k shifts in exact
    # multiples of BATCH (no batch mixing; pad zeros give the boundary taps).
    pad_ref[pl.ds(0, _LPAD), :] = jnp.zeros((_LPAD, C), jnp.float32)
    pad_ref[pl.ds(_LPAD + R, _LPAD), :] = jnp.zeros((_LPAD, C), jnp.float32)
    pad_ref[pl.ds(_LPAD, R), :] = y

    wd = wd_ref[...]                                         # (_KPAD, C), BN scale folded in
    acc = jnp.zeros_like(y)
    for k in range(KSIZE):                                   # static unroll, small live temps
        off = _LPAD - PAD * BATCH + k * BATCH                # static sublane offset
        acc = acc + pad_ref[pl.ds(off, R), :] * wd[k:k + 1, :]

    # ---- BatchNorm (eval): scale already folded into wd; add shift. Then SiLU ----
    z = acc + bn_shift
    z = z * jax.nn.sigmoid(z)

    # ---- pointwise conv2 (1x1 conv == matmul) ----
    out = jnp.dot(z, w2_ref[...], preferred_element_type=jnp.float32) + b2

    # dropout: identity at inference
    # TODO(synk): training-mode dropout would need pltpu.prng_* masking.
    o_ref[...] = out.astype(o_ref.dtype)


def prepare_params(p):
    """Fold/fuse/pack parameters ONCE at init (kept OUT of the jitted forward)."""
    C = DIM

    # Fuse GLU halves and fold the LayerNorm affine into conv1:
    #   (xhat*g + b) @ W + bW == xhat @ (diag(g) W) + (b @ W + bW)
    w1 = jnp.concatenate([p["w1a"], p["w1b"]], axis=1)        # (C, 2C)
    b1 = jnp.concatenate([p["b1a"], p["b1b"]], axis=1)        # (1, 2C)
    w1f = p["ln_g"].reshape(C, 1) * w1                        # (C, 2C)
    b1f = p["ln_b"] @ w1 + b1                                 # (1, 2C)

    # BatchNorm(eval) per-channel scale folded into the raw depthwise weights.
    wd_scaled = p["wd"] * p["bn_scale"]                       # (K, C)
    wd_packed = jnp.zeros((_KPAD, C), jnp.float32).at[:KSIZE].set(wd_scaled)

    # Pack all per-channel vectors into one (8, 2C) slab (single tiny DMA).
    vecs = jnp.zeros((8, 2 * C), jnp.float32)
    vecs = vecs.at[0, :].set(b1f[0])
    vecs = vecs.at[1, :C].set(p["bn_shift"][0])
    vecs = vecs.at[1, C:].set(p["b2"][0])
    return {"vecs": vecs, "w1f": w1f, "w2": p["w2"], "wd": wd_packed}


def conformer_conv_module(x_tbc, packed):
    """x_tbc: (T, B, C) float32; packed: dict from prepare_params -> (T, B, C)."""
    # Free row-major reshape (no transpose, no HBM copy): row r = t*B + b.
    x2 = x_tbc.reshape(ROWS, DIM)

    out2 = pl.pallas_call(
        conformer_conv_kernel,
        out_shape=jax.ShapeDtypeStruct((ROWS, DIM), jnp.float32),
        # No grid: whole arrays are single VMEM-resident blocks (total << VMEM).
        scratch_shapes=[pltpu.VMEM((_PADDED_ROWS, DIM), jnp.float32)],
    )(x2, packed["vecs"], packed["w1f"], packed["w2"], packed["wd"])

    return out2.reshape(SEQ, BATCH, DIM)


def reference(x_tbc, p):
    """Pure-JAX reference mirroring the PyTorch forward (eval mode, unfused)."""
    x = x_tbc.astype(jnp.float32)                             # (T, B, C)
    mean = jnp.mean(x, axis=-1, keepdims=True)
    var = jnp.mean((x - mean) ** 2, axis=-1, keepdims=True)
    x = (x - mean) * jax.lax.rsqrt(var + LN_EPS) * p["ln_g"][0] + p["ln_b"][0]
    a = jnp.einsum("tbc,cd->tbd", x, p["w1a"]) + p["b1a"][0]
    g = jnp.einsum("tbc,cd->tbd", x, p["w1b"]) + p["b1b"][0]
    y = a * jax.nn.sigmoid(g)                                 # (T, B, C)
    y_pad = jnp.pad(y, ((PAD, PAD), (0, 0), (0, 0)))
    acc = jnp.zeros_like(y)
    for k in range(KSIZE):
        acc = acc + y_pad[k:k + SEQ] * p["wd"][k][None, None, :]
    z = acc * p["bn_scale"][0] + p["bn_shift"][0]
    z = z * jax.nn.sigmoid(z)
    out = jnp.einsum("tbc,cd->tbd", z, p["w2"]) + p["b2"][0]
    return out                                                # (T, B, C)


def init_params(key):
    ks = jax.random.split(key, 12)
    f32 = jnp.float32
    params = {
        "ln_g": 1.0 + 0.1 * jax.random.normal(ks[0], (1, DIM), f32),
        "ln_b": 0.1 * jax.random.normal(ks[1], (1, DIM), f32),
        # pointwise_conv1: torch weight (2C, C, 1) split into value/gate halves,
        # stored transposed as (C, C) each so x @ w == conv1d(x, w).
        "w1a": 0.1 * jax.random.normal(ks[2], (DIM, DIM), f32),
        "w1b": 0.1 * jax.random.normal(ks[3], (DIM, DIM), f32),
        "b1a": 0.1 * jax.random.normal(ks[4], (1, DIM), f32),
        "b1b": 0.1 * jax.random.normal(ks[5], (1, DIM), f32),
        # depthwise_conv: torch weight (C, 1, K) stored as (K, C), no bias.
        "wd": 0.1 * jax.random.normal(ks[6], (KSIZE, DIM), f32),
        # pointwise_conv2: torch weight (C, C, 1) stored transposed as (C, C).
        "w2": 0.1 * jax.random.normal(ks[7], (DIM, DIM), f32),
        "b2": 0.1 * jax.random.normal(ks[8], (1, DIM), f32),
    }
    # BatchNorm1d(eval): fold running stats + affine into per-channel scale/shift.
    bn_gamma = 1.0 + 0.1 * jax.random.normal(ks[9], (1, DIM), f32)
    bn_beta = 0.1 * jax.random.normal(ks[10], (1, DIM), f32)
    bn_mean = 0.1 * jax.random.normal(ks[11], (1, DIM), f32)
    bn_var = jnp.full((1, DIM), 1.0, f32)
    scale = bn_gamma * jax.lax.rsqrt(bn_var + BN_EPS)
    params["bn_scale"] = scale
    params["bn_shift"] = bn_beta - bn_mean * scale
    return params


if __name__ == "__main__":
    key = jax.random.PRNGKey(0)
    k_x, k_p = jax.random.split(key)
    x = jax.random.normal(k_x, (SEQ, BATCH, DIM), jnp.float32)   # (T, B, C)
    params = init_params(k_p)

    # Parameter folding/packing runs once here, outside the jitted per-call path.
    packed = jax.block_until_ready(prepare_params(params))

    fwd = jax.jit(conformer_conv_module)
    out = jax.block_until_ready(fwd(x, packed))
    ref = jax.block_until_ready(reference(x, params))

    assert out.shape == (SEQ, BATCH, DIM)
    np.testing.assert_allclose(np.asarray(out), np.asarray(ref), rtol=2e-2, atol=2e-2)
    print("KERNEL_OK")
</pallas_src>

<mosaic_0001>
module attributes {stable_mosaic.version = 11 : i64} {
  func.func @conformer_conv_kernel(%arg0: memref<32x32xf32, #tpu.memory_space<vmem>>, %arg1: memref<8x64xf32, #tpu.memory_space<vmem>>, %arg2: memref<32x64xf32, #tpu.memory_space<vmem>>, %arg3: memref<32x32xf32, #tpu.memory_space<vmem>>, %arg4: memref<32x32xf32, #tpu.memory_space<vmem>>, %arg5: memref<32x32xf32, #tpu.memory_space<vmem>>, %arg6: memref<96x32xf32, #tpu.memory_space<vmem>>) attributes {dimension_semantics = [], scalar_prefetch = 0 : i64, scratch_operands = 1 : i64, tpu.core_type = #tpu.core_type<tc>} {
    %c0 = arith.constant 0 : index
    %c0_0 = arith.constant 0 : index
    %0 = vector.load %arg0[%c0, %c0_0] : memref<32x32xf32, #tpu.memory_space<vmem>>, vector<32x32xf32>
    %c0_1 = arith.constant 0 : index
    %c0_2 = arith.constant 0 : index
    %1 = vector.load %arg1[%c0_1, %c0_2] : memref<8x64xf32, #tpu.memory_space<vmem>>, vector<8x64xf32>
    %2 = vector.extract_strided_slice %1 {offsets = [0, 0], sizes = [1, 64], strides = [1, 1]} : vector<8x64xf32> to vector<1x64xf32>
    %3 = vector.extract_strided_slice %1 {offsets = [1, 0], sizes = [1, 32], strides = [1, 1]} : vector<8x64xf32> to vector<1x32xf32>
    %4 = vector.extract_strided_slice %1 {offsets = [1, 32], sizes = [1, 32], strides = [1, 1]} : vector<8x64xf32> to vector<1x32xf32>
    %cst = arith.constant dense<0.000000e+00> : vector<32xf32>
    %5 = vector.multi_reduction <add>, %0, %cst [1] : vector<32x32xf32> to vector<32xf32>
    %6 = vector.shape_cast %5 : vector<32xf32> to vector<32x1xf32>
    %cst_3 = arith.constant 3.200000e+01 : f32
    %7 = vector.broadcast %cst_3 : f32 to vector<32x1xf32>
    %8 = arith.divf %6, %7 : vector<32x1xf32>
    %9 = vector.broadcast %8 : vector<32x1xf32> to vector<32x32xf32>
    %10 = arith.subf %0, %9 : vector<32x32xf32>
    %11 = arith.mulf %10, %10 : vector<32x32xf32>
    %cst_4 = arith.constant dense<0.000000e+00> : vector<32xf32>
    %12 = vector.multi_reduction <add>, %11, %cst_4 [1] : vector<32x32xf32> to vector<32xf32>
    %13 = vector.shape_cast %12 : vector<32xf32> to vector<32x1xf32>
    %cst_5 = arith.constant 3.200000e+01 : f32
    %14 = vector.broadcast %cst_5 : f32 to vector<32x1xf32>
    %15 = arith.divf %13, %14 : vector<32x1xf32>
    %cst_6 = arith.constant 9.99999974E-6 : f32
    %16 = vector.broadcast %cst_6 : f32 to vector<32x1xf32>
    %17 = arith.addf %15, %16 : vector<32x1xf32>
    %18 = math.rsqrt %17 : vector<32x1xf32>
    %19 = vector.broadcast %18 : vector<32x1xf32> to vector<32x32xf32>
    %20 = arith.mulf %10, %19 : vector<32x32xf32>
    %c0_7 = arith.constant 0 : index
    %c0_8 = arith.constant 0 : index
    %21 = vector.load %arg2[%c0_7, %c0_8] : memref<32x64xf32, #tpu.memory_space<vmem>>, vector<32x64xf32>
    %cst_9 = arith.constant dense<0.000000e+00> : vector<32x64xf32>
    %22 = tpu.matmul %20, %21, %cst_9 {dimension_numbers = #tpu.dot_dimension_numbers<[1], [0], [0], [1], [0, 0, 1, 1], [], []>} : vector<32x32xf32>, vector<32x64xf32>, vector<32x64xf32> -> vector<32x64xf32>
    %23 = vector.broadcast %2 : vector<1x64xf32> to vector<32x64xf32>
    %24 = arith.addf %22, %23 : vector<32x64xf32>
    %25 = vector.extract_strided_slice %24 {offsets = [0, 0], sizes = [32, 32], strides = [1, 1]} : vector<32x64xf32> to vector<32x32xf32>
    %26 = vector.extract_strided_slice %24 {offsets = [0, 32], sizes = [32, 32], strides = [1, 1]} : vector<32x64xf32> to vector<32x32xf32>
    %27 = arith.negf %26 : vector<32x32xf32>
    %28 = math.exp %27 : vector<32x32xf32>
    %cst_10 = arith.constant 1.000000e+00 : f32
    %29 = vector.broadcast %cst_10 : f32 to vector<32x32xf32>
    %30 = arith.addf %29, %28 : vector<32x32xf32>
    %31 = arith.divf %29, %30 : vector<32x32xf32>
    %32 = arith.mulf %25, %31 : vector<32x32xf32>
    %cst_11 = arith.constant 0.000000e+00 : f32
    %33 = vector.broadcast %cst_11 : f32 to vector<32x32xf32>
    %c0_12 = arith.constant 0 : index
    %c0_13 = arith.constant 0 : index
    %34 = vector.load %arg6[%c0_12, %c0_13] : memref<96x32xf32, #tpu.memory_space<vmem>>, vector<32x32xf32>
    tpu.vector_store %arg6[%c0_12, %c0_13], %33 {strides = array<i32>} : memref<96x32xf32, #tpu.memory_space<vmem>>, vector<32x32xf32>,
    %cst_14 = arith.constant 0.000000e+00 : f32
    %35 = vector.broadcast %cst_14 : f32 to vector<32x32xf32>
    %c64 = arith.constant 64 : index
    %c0_15 = arith.constant 0 : index
    %36 = vector.load %arg6[%c64, %c0_15] : memref<96x32xf32, #tpu.memory_space<vmem>>, vector<32x32xf32>
    tpu.vector_store %arg6[%c64, %c0_15], %35 {strides = array<i32>} : memref<96x32xf32, #tpu.memory_space<vmem>>, vector<32x32xf32>,
    %c32 = arith.constant 32 : index
    %c0_16 = arith.constant 0 : index
    %37 = vector.load %arg6[%c32, %c0_16] : memref<96x32xf32, #tpu.memory_space<vmem>>, vector<32x32xf32>
    tpu.vector_store %arg6[%c32, %c0_16], %32 {strides = array<i32>} : memref<96x32xf32, #tpu.memory_space<vmem>>, vector<32x32xf32>,
    %c0_17 = arith.constant 0 : index
    %c0_18 = arith.constant 0 : index
    %38 = vector.load %arg4[%c0_17, %c0_18] : memref<32x32xf32, #tpu.memory_space<vmem>>, vector<32x32xf32>
    %cst_19 = arith.constant 0.000000e+00 : f32
    %39 = vector.broadcast %cst_19 : f32 to vector<32x32xf32>
    %c2 = arith.constant 2 : index
    %c0_20 = arith.constant 0 : index
    %40 = vector.load %arg6[%c2, %c0_20] : memref<96x32xf32, #tpu.memory_space<vmem>>, vector<32x32xf32>
    %41 = vector.extract_strided_slice %38 {offsets = [0, 0], sizes = [1, 32], strides = [1, 1]} : vector<32x32xf32> to vector<1x32xf32>
    %42 = vector.broadcast %41 : vector<1x32xf32> to vector<32x32xf32>
    %43 = arith.mulf %40, %42 : vector<32x32xf32>
    %44 = arith.addf %39, %43 : vector<32x32xf32>
    %c4 = arith.constant 4 : index
    %c0_21 = arith.constant 0 : index
    %45 = vector.load %arg6[%c4, %c0_21] : memref<96x32xf32, #tpu.memory_space<vmem>>, vector<32x32xf32>
    %46 = vector.extract_strided_slice %38 {offsets = [1, 0], sizes = [1, 32], strides = [1, 1]} : vector<32x32xf32> to vector<1x32xf32>
    %47 = vector.broadcast %46 : vector<1x32xf32> to vector<32x32xf32>
    %48 = arith.mulf %45, %47 : vector<32x32xf32>
    %49 = arith.addf %44, %48 : vector<32x32xf32>
    %c6 = arith.constant 6 : index
    %c0_22 = arith.constant 0 : index
    %50 = vector.load %arg6[%c6, %c0_22] : memref<96x32xf32, #tpu.memory_space<vmem>>, vector<32x32xf32>
    %51 = vector.extract_strided_slice %38 {offsets = [2, 0], sizes = [1, 32], strides = [1, 1]} : vector<32x32xf32> to vector<1x32xf32>
    %52 = vector.broadcast %51 : vector<1x32xf32> to vector<32x32xf32>
    %53 = arith.mulf %50, %52 : vector<32x32xf32>
    %54 = arith.addf %49, %53 : vector<32x32xf32>
    %c8 = arith.constant 8 : index
    %c0_23 = arith.constant 0 : index
    %55 = vector.load %arg6[%c8, %c0_23] : memref<96x32xf32, #tpu.memory_space<vmem>>, vector<32x32xf32>
    %56 = vector.extract_strided_slice %38 {offsets = [3, 0], sizes = [1, 32], strides = [1, 1]} : vector<32x32xf32> to vector<1x32xf32>
    %57 = vector.broadcast %56 : vector<1x32xf32> to vector<32x32xf32>
    %58 = arith.mulf %55, %57 : vector<32x32xf32>
    %59 = arith.addf %54, %58 : vector<32x32xf32>
    %c10 = arith.constant 10 : index
    %c0_24 = arith.constant 0 : index
    %60 = vector.load %arg6[%c10, %c0_24] : memref<96x32xf32, #tpu.memory_space<vmem>>, vector<32x32xf32>
    %61 = vector.extract_strided_slice %38 {offsets = [4, 0], sizes = [1, 32], strides = [1, 1]} : vector<32x32xf32> to vector<1x32xf32>
    %62 = vector.broadcast %61 : vector<1x32xf32> to vector<32x32xf32>
    %63 = arith.mulf %60, %62 : vector<32x32xf32>
    %64 = arith.addf %59, %63 : vector<32x32xf32>
    %c12 = arith.constant 12 : index
    %c0_25 = arith.constant 0 : index
    %65 = vector.load %arg6[%c12, %c0_25] : memref<96x32xf32, #tpu.memory_space<vmem>>, vector<32x32xf32>
    %66 = vector.extract_strided_slice %38 {offsets = [5, 0], sizes = [1, 32], strides = [1, 1]} : vector<32x32xf32> to vector<1x32xf32>
    %67 = vector.broadcast %66 : vector<1x32xf32> to vector<32x32xf32>
    %68 = arith.mulf %65, %67 : vector<32x32xf32>
    %69 = arith.addf %64, %68 : vector<32x32xf32>
    %c14 = arith.constant 14 : index
    %c0_26 = arith.constant 0 : index
    %70 = vector.load %arg6[%c14, %c0_26] : memref<96x32xf32, #tpu.memory_space<vmem>>, vector<32x32xf32>
    %71 = vector.extract_strided_slice %38 {offsets = [6, 0], sizes = [1, 32], strides = [1, 1]} : vector<32x32xf32> to vector<1x32xf32>
    %72 = vector.broadcast %71 : vector<1x32xf32> to vector<32x32xf32>
    %73 = arith.mulf %70, %72 : vector<32x32xf32>
    %74 = arith.addf %69, %73 : vector<32x32xf32>
    %c16 = arith.constant 16 : index
    %c0_27 = arith.constant 0 : index
    %75 = vector.load %arg6[%c16, %c0_27] : memref<96x32xf32, #tpu.memory_space<vmem>>, vector<32x32xf32>
    %76 = vector.extract_strided_slice %38 {offsets = [7, 0], sizes = [1, 32], strides = [1, 1]} : vector<32x32xf32> to vector<1x32xf32>
    %77 = vector.broadcast %76 : vector<1x32xf32> to vector<32x32xf32>
    %78 = arith.mulf %75, %77 : vector<32x32xf32>
    %79 = arith.addf %74, %78 : vector<32x32xf32>
    %c18 = arith.constant 18 : index
    %c0_28 = arith.constant 0 : index
    %80 = vector.load %arg6[%c18, %c0_28] : memref<96x32xf32, #tpu.memory_space<vmem>>, vector<32x32xf32>
    %81 = vector.extract_strided_slice %38 {offsets = [8, 0], sizes = [1, 32], strides = [1, 1]} : vector<32x32xf32> to vector<1x32xf32>
    %82 = vector.broadcast %81 : vector<1x32xf32> to vector<32x32xf32>
    %83 = arith.mulf %80, %82 : vector<32x32xf32>
    %84 = arith.addf %79, %83 : vector<32x32xf32>
    %c20 = arith.constant 20 : index
    %c0_29 = arith.constant 0 : index
    %85 = vector.load %arg6[%c20, %c0_29] : memref<96x32xf32, #tpu.memory_space<vmem>>, vector<32x32xf32>
    %86 = vector.extract_strided_slice %38 {offsets = [9, 0], sizes = [1, 32], strides = [1, 1]} : vector<32x32xf32> to vector<1x32xf32>
    %87 = vector.broadcast %86 : vector<1x32xf32> to vector<32x32xf32>
    %88 = arith.mulf %85, %87 : vector<32x32xf32>
    %89 = arith.addf %84, %88 : vector<32x32xf32>
    %c22 = arith.constant 22 : index
    %c0_30 = arith.constant 0 : index
    %90 = vector.load %arg6[%c22, %c0_30] : memref<96x32xf32, #tpu.memory_space<vmem>>, vector<32x32xf32>
    %91 = vector.extract_strided_slice %38 {offsets = [10, 0], sizes = [1, 32], strides = [1, 1]} : vector<32x32xf32> to vector<1x32xf32>
    %92 = vector.broadcast %91 : vector<1x32xf32> to vector<32x32xf32>
    %93 = arith.mulf %90, %92 : vector<32x32xf32>
    %94 = arith.addf %89, %93 : vector<32x32xf32>
    %c24 = arith.constant 24 : index
    %c0_31 = arith.constant 0 : index
    %95 = vector.load %arg6[%c24, %c0_31] : memref<96x32xf32, #tpu.memory_space<vmem>>, vector<32x32xf32>
    %96 = vector.extract_strided_slice %38 {offsets = [11, 0], sizes = [1, 32], strides = [1, 1]} : vector<32x32xf32> to vector<1x32xf32>
    %97 = vector.broadcast %96 : vector<1x32xf32> to vector<32x32xf32>
    %98 = arith.mulf %95, %97 : vector<32x32xf32>
    %99 = arith.addf %94, %98 : vector<32x32xf32>
    %c26 = arith.constant 26 : index
    %c0_32 = arith.constant 0 : index
    %100 = vector.load %arg6[%c26, %c0_32] : memref<96x32xf32, #tpu.memory_space<vmem>>, vector<32x32xf32>
    %101 = vector.extract_strided_slice %38 {offsets = [12, 0], sizes = [1, 32], strides = [1, 1]} : vector<32x32xf32> to vector<1x32xf32>
    %102 = vector.broadcast %101 : vector<1x32xf32> to vector<32x32xf32>
    %103 = arith.mulf %100, %102 : vector<32x32xf32>
    %104 = arith.addf %99, %103 : vector<32x32xf32>
    %c28 = arith.constant 28 : index
    %c0_33 = arith.constant 0 : index
    %105 = vector.load %arg6[%c28, %c0_33] : memref<96x32xf32, #tpu.memory_space<vmem>>, vector<32x32xf32>
    %106 = vector.extract_strided_slice %38 {offsets = [13, 0], sizes = [1, 32], strides = [1, 1]} : vector<32x32xf32> to vector<1x32xf32>
    %107 = vector.broadcast %106 : vector<1x32xf32> to vector<32x32xf32>
    %108 = arith.mulf %105, %107 : vector<32x32xf32>
    %109 = arith.addf %104, %108 : vector<32x32xf32>
    %c30 = arith.constant 30 : index
    %c0_34 = arith.constant 0 : index
    %110 = vector.load %arg6[%c30, %c0_34] : memref<96x32xf32, #tpu.memory_space<vmem>>, vector<32x32xf32>
    %111 = vector.extract_strided_slice %38 {offsets = [14, 0], sizes = [1, 32], strides = [1, 1]} : vector<32x32xf32> to vector<1x32xf32>
    %112 = vector.broadcast %111 : vector<1x32xf32> to vector<32x32xf32>
    %113 = arith.mulf %110, %112 : vector<32x32xf32>
    %114 = arith.addf %109, %113 : vector<32x32xf32>
    %c32_35 = arith.constant 32 : index
    %c0_36 = arith.constant 0 : index
    %115 = vector.load %arg6[%c32_35, %c0_36] : memref<96x32xf32, #tpu.memory_space<vmem>>, vector<32x32xf32>
    %116 = vector.extract_strided_slice %38 {offsets = [15, 0], sizes = [1, 32], strides = [1, 1]} : vector<32x32xf32> to vector<1x32xf32>
    %117 = vector.broadcast %116 : vector<1x32xf32> to vector<32x32xf32>
    %118 = arith.mulf %115, %117 : vector<32x32xf32>
    %119 = arith.addf %114, %118 : vector<32x32xf32>
    %c34 = arith.constant 34 : index
    %c0_37 = arith.constant 0 : index
    %120 = vector.load %arg6[%c34, %c0_37] : memref<96x32xf32, #tpu.memory_space<vmem>>, vector<32x32xf32>
    %121 = vector.extract_strided_slice %38 {offsets = [16, 0], sizes = [1, 32], strides = [1, 1]} : vector<32x32xf32> to vector<1x32xf32>
    %122 = vector.broadcast %121 : vector<1x32xf32> to vector<32x32xf32>
    %123 = arith.mulf %120, %122 : vector<32x32xf32>
    %124 = arith.addf %119, %123 : vector<32x32xf32>
    %c36 = arith.constant 36 : index
    %c0_38 = arith.constant 0 : index
    %125 = vector.load %arg6[%c36, %c0_38] : memref<96x32xf32, #tpu.memory_space<vmem>>, vector<32x32xf32>
    %126 = vector.extract_strided_slice %38 {offsets = [17, 0], sizes = [1, 32], strides = [1, 1]} : vector<32x32xf32> to vector<1x32xf32>
    %127 = vector.broadcast %126 : vector<1x32xf32> to vector<32x32xf32>
    %128 = arith.mulf %125, %127 : vector<32x32xf32>
    %129 = arith.addf %124, %128 : vector<32x32xf32>
    %c38 = arith.constant 38 : index
    %c0_39 = arith.constant 0 : index
    %130 = vector.load %arg6[%c38, %c0_39] : memref<96x32xf32, #tpu.memory_space<vmem>>, vector<32x32xf32>
    %131 = vector.extract_strided_slice %38 {offsets = [18, 0], sizes = [1, 32], strides = [1, 1]} : vector<32x32xf32> to vector<1x32xf32>
    %132 = vector.broadcast %131 : vector<1x32xf32> to vector<32x32xf32>
    %133 = arith.mulf %130, %132 : vector<32x32xf32>
    %134 = arith.addf %129, %133 : vector<32x32xf32>
    %c40 = arith.constant 40 : index
    %c0_40 = arith.constant 0 : index
    %135 = vector.load %arg6[%c40, %c0_40] : memref<96x32xf32, #tpu.memory_space<vmem>>, vector<32x32xf32>
    %136 = vector.extract_strided_slice %38 {offsets = [19, 0], sizes = [1, 32], strides = [1, 1]} : vector<32x32xf32> to vector<1x32xf32>
    %137 = vector.broadcast %136 : vector<1x32xf32> to vector<32x32xf32>
    %138 = arith.mulf %135, %137 : vector<32x32xf32>
    %139 = arith.addf %134, %138 : vector<32x32xf32>
    %c42 = arith.constant 42 : index
    %c0_41 = arith.constant 0 : index
    %140 = vector.load %arg6[%c42, %c0_41] : memref<96x32xf32, #tpu.memory_space<vmem>>, vector<32x32xf32>
    %141 = vector.extract_strided_slice %38 {offsets = [20, 0], sizes = [1, 32], strides = [1, 1]} : vector<32x32xf32> to vector<1x32xf32>
    %142 = vector.broadcast %141 : vector<1x32xf32> to vector<32x32xf32>
    %143 = arith.mulf %140, %142 : vector<32x32xf32>
    %144 = arith.addf %139, %143 : vector<32x32xf32>
    %c44 = arith.constant 44 : index
    %c0_42 = arith.constant 0 : index
    %145 = vector.load %arg6[%c44, %c0_42] : memref<96x32xf32, #tpu.memory_space<vmem>>, vector<32x32xf32>
    %146 = vector.extract_strided_slice %38 {offsets = [21, 0], sizes = [1, 32], strides = [1, 1]} : vector<32x32xf32> to vector<1x32xf32>
    %147 = vector.broadcast %146 : vector<1x32xf32> to vector<32x32xf32>
    %148 = arith.mulf %145, %147 : vector<32x32xf32>
    %149 = arith.addf %144, %148 : vector<32x32xf32>
    %c46 = arith.constant 46 : index
    %c0_43 = arith.constant 0 : index
    %150 = vector.load %arg6[%c46, %c0_43] : memref<96x32xf32, #tpu.memory_space<vmem>>, vector<32x32xf32>
    %151 = vector.extract_strided_slice %38 {offsets = [22, 0], sizes = [1, 32], strides = [1, 1]} : vector<32x32xf32> to vector<1x32xf32>
    %152 = vector.broadcast %151 : vector<1x32xf32> to vector<32x32xf32>
    %153 = arith.mulf %150, %152 : vector<32x32xf32>
    %154 = arith.addf %149, %153 : vector<32x32xf32>
    %c48 = arith.constant 48 : index
    %c0_44 = arith.constant 0 : index
    %155 = vector.load %arg6[%c48, %c0_44] : memref<96x32xf32, #tpu.memory_space<vmem>>, vector<32x32xf32>
    %156 = vector.extract_strided_slice %38 {offsets = [23, 0], sizes = [1, 32], strides = [1, 1]} : vector<32x32xf32> to vector<1x32xf32>
    %157 = vector.broadcast %156 : vector<1x32xf32> to vector<32x32xf32>
    %158 = arith.mulf %155, %157 : vector<32x32xf32>
    %159 = arith.addf %154, %158 : vector<32x32xf32>
    %c50 = arith.constant 50 : index
    %c0_45 = arith.constant 0 : index
    %160 = vector.load %arg6[%c50, %c0_45] : memref<96x32xf32, #tpu.memory_space<vmem>>, vector<32x32xf32>
    %161 = vector.extract_strided_slice %38 {offsets = [24, 0], sizes = [1, 32], strides = [1, 1]} : vector<32x32xf32> to vector<1x32xf32>
    %162 = vector.broadcast %161 : vector<1x32xf32> to vector<32x32xf32>
    %163 = arith.mulf %160, %162 : vector<32x32xf32>
    %164 = arith.addf %159, %163 : vector<32x32xf32>
    %c52 = arith.constant 52 : index
    %c0_46 = arith.constant 0 : index
    %165 = vector.load %arg6[%c52, %c0_46] : memref<96x32xf32, #tpu.memory_space<vmem>>, vector<32x32xf32>
    %166 = vector.extract_strided_slice %38 {offsets = [25, 0], sizes = [1, 32], strides = [1, 1]} : vector<32x32xf32> to vector<1x32xf32>
    %167 = vector.broadcast %166 : vector<1x32xf32> to vector<32x32xf32>
    %168 = arith.mulf %165, %167 : vector<32x32xf32>
    %169 = arith.addf %164, %168 : vector<32x32xf32>
    %c54 = arith.constant 54 : index
    %c0_47 = arith.constant 0 : index
    %170 = vector.load %arg6[%c54, %c0_47] : memref<96x32xf32, #tpu.memory_space<vmem>>, vector<32x32xf32>
    %171 = vector.extract_strided_slice %38 {offsets = [26, 0], sizes = [1, 32], strides = [1, 1]} : vector<32x32xf32> to vector<1x32xf32>
    %172 = vector.broadcast %171 : vector<1x32xf32> to vector<32x32xf32>
    %173 = arith.mulf %170, %172 : vector<32x32xf32>
    %174 = arith.addf %169, %173 : vector<32x32xf32>
    %c56 = arith.constant 56 : index
    %c0_48 = arith.constant 0 : index
    %175 = vector.load %arg6[%c56, %c0_48] : memref<96x32xf32, #tpu.memory_space<vmem>>, vector<32x32xf32>
    %176 = vector.extract_strided_slice %38 {offsets = [27, 0], sizes = [1, 32], strides = [1, 1]} : vector<32x32xf32> to vector<1x32xf32>
    %177 = vector.broadcast %176 : vector<1x32xf32> to vector<32x32xf32>
    %178 = arith.mulf %175, %177 : vector<32x32xf32>
    %179 = arith.addf %174, %178 : vector<32x32xf32>
    %c58 = arith.constant 58 : index
    %c0_49 = arith.constant 0 : index
    %180 = vector.load %arg6[%c58, %c0_49] : memref<96x32xf32, #tpu.memory_space<vmem>>, vector<32x32xf32>
    %181 = vector.extract_strided_slice %38 {offsets = [28, 0], sizes = [1, 32], strides = [1, 1]} : vector<32x32xf32> to vector<1x32xf32>
    %182 = vector.broadcast %181 : vector<1x32xf32> to vector<32x32xf32>
    %183 = arith.mulf %180, %182 : vector<32x32xf32>
    %184 = arith.addf %179, %183 : vector<32x32xf32>
    %c60 = arith.constant 60 : index
    %c0_50 = arith.constant 0 : index
    %185 = vector.load %arg6[%c60, %c0_50] : memref<96x32xf32, #tpu.memory_space<vmem>>, vector<32x32xf32>
    %186 = vector.extract_strided_slice %38 {offsets = [29, 0], sizes = [1, 32], strides = [1, 1]} : vector<32x32xf32> to vector<1x32xf32>
    %187 = vector.broadcast %186 : vector<1x32xf32> to vector<32x32xf32>
    %188 = arith.mulf %185, %187 : vector<32x32xf32>
    %189 = arith.addf %184, %188 : vector<32x32xf32>
    %c62 = arith.constant 62 : index
    %c0_51 = arith.constant 0 : index
    %190 = vector.load %arg6[%c62, %c0_51] : memref<96x32xf32, #tpu.memory_space<vmem>>, vector<32x32xf32>
    %191 = vector.extract_strided_slice %38 {offsets = [30, 0], sizes = [1, 32], strides = [1, 1]} : vector<32x32xf32> to vector<1x32xf32>
    %192 = vector.broadcast %191 : vector<1x32xf32> to vector<32x32xf32>
    %193 = arith.mulf %190, %192 : vector<32x32xf32>
    %194 = arith.addf %189, %193 : vector<32x32xf32>
    %195 = vector.broadcast %3 : vector<1x32xf32> to vector<32x32xf32>
    %196 = arith.addf %194, %195 : vector<32x32xf32>
    %197 = arith.negf %196 : vector<32x32xf32>
    %198 = math.exp %197 : vector<32x32xf32>
    %cst_52 = arith.constant 1.000000e+00 : f32
    %199 = vector.broadcast %cst_52 : f32 to vector<32x32xf32>
    %200 = arith.addf %199, %198 : vector<32x32xf32>
    %201 = arith.divf %199, %200 : vector<32x32xf32>
    %202 = arith.mulf %196, %201 : vector<32x32xf32>
    %c0_53 = arith.constant 0 : index
    %c0_54 = arith.constant 0 : index
    %203 = vector.load %arg3[%c0_53, %c0_54] : memref<32x32xf32, #tpu.memory_space<vmem>>, vector<32x32xf32>
    %cst_55 = arith.constant dense<0.000000e+00> : vector<32x32xf32>
    %204 = tpu.matmul %202, %203, %cst_55 {dimension_numbers = #tpu.dot_dimension_numbers<[1], [0], [0], [1], [0, 0, 1, 1], [], []>} : vector<32x32xf32>, vector<32x32xf32>, vector<32x32xf32> -> vector<32x32xf32>
    %205 = vector.broadcast %4 : vector<1x32xf32> to vector<32x32xf32>
    %206 = arith.addf %204, %205 : vector<32x32xf32>
    %c0_56 = arith.constant 0 : index
    %c0_57 = arith.constant 0 : index
    %207 = vector.load %arg5[%c0_56, %c0_57] : memref<32x32xf32, #tpu.memory_space<vmem>>, vector<32x32xf32>
    tpu.vector_store %arg5[%c0_56, %c0_57], %206 {strides = array<i32>} : memref<32x32xf32, #tpu.memory_space<vmem>>, vector<32x32xf32>,
    return
  }
}

</mosaic_0001>

<llo_original>
// kernel: conformer_conv_module.1
$region0: #{conformer_conv_module.1}
  #allocation0 [shape = 'u32[]', space=smem, size = 0x4, offset = 0x4, fixed_abs, tag = 'smem constant byte address 0x4 - core index']
  #allocation1 [shape = 'u32[144,128]{1,0:T(1,128)}', space=vmem, size = 0x12000, scoped, tag = 'internal scratch']
  #allocation2 [shape = 'f32[96,32]{1,0:T(8,128)}', space=vmem, size = 0xc000, scoped, tag = 'scratch operand']
  %s0 = inlined_call_operand.hbm [shape: f32[32,32], index: 0, kind: input, shape index: {}]
  %s1 = inlined_call_operand.hbm [shape: f32[8,64], index: 1, kind: input, shape index: {}]
  %s2 = inlined_call_operand.hbm [shape: f32[32,64], index: 2, kind: input, shape index: {}]
  %s3 = inlined_call_operand.hbm [shape: f32[32,32], index: 3, kind: input, shape index: {}]
  %s4 = inlined_call_operand.hbm [shape: f32[32,32], index: 4, kind: input, shape index: {}]
  %s5 = inlined_call_operand.hbm [shape: f32[32,32], index: 5, kind: output, shape index: {}]
  %s6 = sld [smem:[#allocation0]]
  $region50: #{conformer_conv_module.1} parent=0
    _
  %s8 = ssub.s32 1, %s6
  %s9 = scalar_select 0, %s8, %s6
  $region1: #{conformer_conv_module.1} parent=0
    #allocation3 [shape = 'u8[16384]{0}', space=vmem, size = 0x4000, scoped, tag = 'input window, operand 0, single buffered']
    #allocation4 [shape = 's32[1]{0}', space=sflag, size = 0x4, scoped, tag = 'scoped memory for conformer_conv_module.1']
    #allocation5 [shape = 's32[1]{0}', space=sflag, size = 0x4, scoped, tag = 'scoped memory for conformer_conv_module.1']
    #allocation6 [shape = 'u8[4096]{0}', space=vmem, size = 0x1000, scoped, tag = 'input window, operand 1, single buffered']
    #allocation7 [shape = 's32[1]{0}', space=sflag, size = 0x4, scoped, tag = 'scoped memory for conformer_conv_module.1']
    #allocation8 [shape = 'u8[16384]{0}', space=vmem, size = 0x4000, scoped, tag = 'input window, operand 2, single buffered']
    #allocation9 [shape = 'u8[16384]{0}', space=vmem, size = 0x4000, scoped, tag = 'input window, operand 3, single buffered']
    #allocation10 [shape = 's32[1]{0}', space=sflag, size = 0x4, scoped, tag = 'scoped memory for conformer_conv_module.1']
    #allocation11 [shape = 'u8[16384]{0}', space=vmem, size = 0x4000, scoped, tag = 'input window, operand 4, single buffered']
    #allocation12 [shape = 'u8[16384]{0}', space=vmem, size = 0x4000, scoped, tag = 'output window, operand 0, single buffered']
    %10 = vsyncpa [#allocation4], 0
    %11 = vsyncpa [#allocation7], 0
    %12 = vsyncpa [#allocation10], 0
    %13 = vsyncpa [#allocation5], 0
    // Predicated region
    $region2: #{conformer_conv_module.1} parent=1 // pred_check
      _
    $region3: #{conformer_conv_module.1} parent=1 // pred_check_branch
      %15 = sbr.rel (0) target = $region5
    $region4: #{conformer_conv_module.1} parent=1 // pred_region
      %s17 = ssub.s32 512, 512
      %18 = vsyncadd [#allocation4], %s17
      %s19 = sshll.u32 [#allocation3], 4
      %s20 = int_to_ptr.vmem [resolvable:$true] %s19
      %25 = dma.hbm_to_vmem [thread:$0]  %s0, 512, %s20, [#allocation4], 128, 128, 8
    $region5: #{conformer_conv_module.1} parent=1 // pred_fallthru
      _
    // Predicated region
    $region6: #{conformer_conv_module.1} parent=1 // pred_check
      _
    $region7: #{conformer_conv_module.1} parent=1 // pred_check_branch
      %27 = sbr.rel (0) target = $region9
    $region8: #{conformer_conv_module.1} parent=1 // pred_region
      %s29 = ssub.s32 128, 128
      %30 = vsyncadd [#allocation7], %s29
      %s32 = sshll.u32 [#allocation6], 4
      %s33 = int_to_ptr.vmem [resolvable:$true] %s32
      %35 = dma.hbm_to_vmem [thread:$0]  %s1, 128, %s33, [#allocation7]
    $region9: #{conformer_conv_module.1} parent=1 // pred_fallthru
      _
    // Predicated region
    $region10: #{conformer_conv_module.1} parent=1 // pred_check
      _
    $region11: #{conformer_conv_module.1} parent=1 // pred_check_branch
      %37 = sbr.rel (0) target = $region13
    $region12: #{conformer_conv_module.1} parent=1 // pred_region
      %s39 = ssub.s32 512, 512
      %40 = vsyncadd [#allocation7], %s39
      %s41 = sshll.u32 [#allocation8], 4
      %s42 = int_to_ptr.vmem [resolvable:$true] %s41
      %47 = dma.hbm_to_vmem [thread:$0]  %s2, 512, %s42, [#allocation7], 128, 128, 8
    $region13: #{conformer_conv_module.1} parent=1 // pred_fallthru
      _
    // Predicated region
    $region14: #{conformer_conv_module.1} parent=1 // pred_check
      _
    $region15: #{conformer_conv_module.1} parent=1 // pred_check_branch
      %49 = sbr.rel (0) target = $region17
    $region16: #{conformer_conv_module.1} parent=1 // pred_region
      %s51 = ssub.s32 512, 512
      %52 = vsyncadd [#allocation10], %s51
      %s53 = sshll.u32 [#allocation9], 4
      %s54 = int_to_ptr.vmem [resolvable:$true] %s53
      %59 = dma.hbm_to_vmem [thread:$0]  %s3, 512, %s54, [#allocation10], 128, 128, 8
    $region17: #{conformer_conv_module.1} parent=1 // pred_fallthru
      _
    // Predicated region
    $region18: #{conformer_conv_module.1} parent=1 // pred_check
      _
    $region19: #{conformer_conv_module.1} parent=1 // pred_check_branch
      %61 = sbr.rel (0) target = $region21
    $region20: #{conformer_conv_module.1} parent=1 // pred_region
      %s63 = ssub.s32 512, 512
      %64 = vsyncadd [#allocation10], %s63
      %s65 = sshll.u32 [#allocation11], 4
      %s66 = int_to_ptr.vmem [resolvable:$true] %s65
      %71 = dma.hbm_to_vmem [thread:$0]  %s4, 512, %s66, [#allocation10], 128, 128, 8
    $region21: #{conformer_conv_module.1} parent=1 // pred_fallthru
      _
    // Predicated region
    $region22: #{conformer_conv_module.1} parent=1 // pred_check
      _
    $region23: #{conformer_conv_module.1} parent=1 // pred_check_branch
      %73 = sbr.rel (0) target = $region25
    $region24: #{conformer_conv_module.1} parent=1 // pred_region
      %74 = dma.done [#allocation4], 512
    $region25: #{conformer_conv_module.1} parent=1 // pred_fallthru
      _
    // Predicated region
    $region26: #{conformer_conv_module.1} parent=1 // pred_check
      _
    $region27: #{conformer_conv_module.1} parent=1 // pred_check_branch
      %76 = sbr.rel (0) target = $region29
    $region28: #{conformer_conv_module.1} parent=1 // pred_region
      %77 = dma.done [#allocation7], 128
    $region29: #{conformer_conv_module.1} parent=1 // pred_fallthru
      _
    // Predicated region
    $region30: #{conformer_conv_module.1} parent=1 // pred_check
      _
    $region31: #{conformer_conv_module.1} parent=1 // pred_check_branch
      %79 = sbr.rel (0) target = $region33
    $region32: #{conformer_conv_module.1} parent=1 // pred_region
      %80 = dma.done [#allocation7], 512
    $region33: #{conformer_conv_module.1} parent=1 // pred_fallthru
      _
    // Predicated region
    $region34: #{conformer_conv_module.1} parent=1 // pred_check
      _
    $region35: #{conformer_conv_module.1} parent=1 // pred_check_branch
      %82 = sbr.rel (0) target = $region37
    $region36: #{conformer_conv_module.1} parent=1 // pred_region
      %83 = dma.done [#allocation10], 512
    $region37: #{conformer_conv_module.1} parent=1 // pred_fallthru
      _
    // Predicated region
    $region38: #{conformer_conv_module.1} parent=1 // pred_check
      _
    $region39: #{conformer_conv_module.1} parent=1 // pred_check_branch
      %85 = sbr.rel (0) target = $region41
    $region40: #{conformer_conv_module.1} parent=1 // pred_region
      %86 = dma.done [#allocation10], 512
    $region41: #{conformer_conv_module.1} parent=1 // pred_fallthru
      _
    %v87 = vld [vmem:[#allocation3] sm:$0xff]
    %v88 = vld [vmem:[#allocation3 + $0x8] sm:$0xff]
    %v89 = vld [vmem:[#allocation3 + $0x10] sm:$0xff]
    %v90 = vld [vmem:[#allocation3 + $0x18] sm:$0xff]
    %v91 = vld [vmem:[#allocation6] sm:$0xff]
    %vm92 = vcmask 261120
    %v93 = vsel %vm92, %v87, 0.0
    %94 = vadd.xlane.f32.xlu0 %v93
    %v95 = vpop.xlane.xlu0 %94
    %v96 = vsel %vm92, %v88, 0.0
    %97 = vadd.xlane.f32.xlu0 %v96
    %v98 = vpop.xlane.xlu0 %97
    %v99 = vsel %vm92, %v89, 0.0
    %100 = vadd.xlane.f32.xlu0 %v99
    %v101 = vpop.xlane.xlu0 %100
    %v102 = vsel %vm92, %v90, 0.0
    %103 = vadd.xlane.f32.xlu0 %v102
    %v104 = vpop.xlane.xlu0 %103
    %v105 = vrcp.pop 32.0
    %v106 = vmul.f32 %v95, %v105
    %v107 = vmul.f32 %v98, %v105
    %v108 = vmul.f32 %v101, %v105
    %v109 = vmul.f32 %v104, %v105
    %v110 = vsub.f32 %v87, %v106
    %v111 = vsub.f32 %v88, %v107
    %v112 = vsub.f32 %v89, %v108
    %v113 = vsub.f32 %v90, %v109
    %v114 = vmul.f32 %v110, %v110
    %v115 = vmul.f32 %v111, %v111
    %v116 = vmul.f32 %v112, %v112
    %v117 = vmul.f32 %v113, %v113
    %v118 = vsel %vm92, %v114, 0.0
    %119 = vadd.xlane.f32.xlu0 %v118
    %v120 = vpop.xlane.xlu0 %119
    %v121 = vsel %vm92, %v115, 0.0
    %122 = vadd.xlane.f32.xlu0 %v121
    %v123 = vpop.xlane.xlu0 %122
    %v124 = vsel %vm92, %v116, 0.0
    %125 = vadd.xlane.f32.xlu0 %v124
    %v126 = vpop.xlane.xlu0 %125
    %v127 = vsel %vm92, %v117, 0.0
    %128 = vadd.xlane.f32.xlu0 %v127
    %v129 = vpop.xlane.xlu0 %128
    %v130 = vmul.f32 %v120, %v105
    %v131 = vmul.f32 %v123, %v105
    %v132 = vmul.f32 %v126, %v105
    %v133 = vmul.f32 %v129, %v105
    %v134 = vadd.f32 %v130, 1e-05
    %v135 = vadd.f32 %v131, 1e-05
    %v136 = vadd.f32 %v132, 1e-05
    %v137 = vadd.f32 %v133, 1e-05
    %v138 = vrsqrt.pop %v134
    %v139 = vrsqrt.pop %v135
    %v140 = vrsqrt.pop %v136
    %v141 = vrsqrt.pop %v137
    %v142 = vmul.f32 %v110, %v138
    %v143 = vmul.f32 %v111, %v139
    %v144 = vmul.f32 %v112, %v140
    %v145 = vmul.f32 %v113, %v141
    %v146 = vld [vmem:[#allocation8] sm:$0xff]
    %v147 = vld [vmem:[#allocation8 + $0x8] sm:$0xff]
    %v148 = vld [vmem:[#allocation8 + $0x10] sm:$0xff]
    %v149 = vld [vmem:[#allocation8 + $0x18] sm:$0xff]
    %v150 = vlaneseq
    %v151 = vshrl.u32 %v150, 7
    %v152 = vsub.s32 0, %v151
    %v153 = vrot.slane %v91, %v152
    %v155 = vsel %vm92, %v142, 0
    %v158 = vsel %vm92, %v143, 0
    %v161 = vsel %vm92, %v144, 0
    %v164 = vsel %vm92, %v145, 0
    %166 = vmatprep.subr.mxu0 0.0
    %167 = vmatpush1.msra.mxu0 %v146
    %168 = vmatprep.subr.mxu0 0.0
    %169 = vmatpush1.msra.mxu0 %v147
    %170 = vmatprep.subr.mxu0 0.0
    %171 = vmatpush1.msra.mxu0 %v148
    %172 = vmatprep.subr.mxu0 0.0
    %173 = vmatpush1.msra.mxu0 %v149
    %174 = vmatprep.subr.mxu0 0.0
    %175 = vmatpush1.msra.mxu0 0.0
    %176 = vmatprep.subr.mxu0 0.0
    %177 = vmatpush1.msra.mxu0 0.0
    %178 = vmatprep.subr.mxu0 0.0
    %179 = vmatpush1.msra.mxu0 0.0
    %180 = vmatprep.subr.mxu0 0.0
    %181 = vmatpush1.msra.mxu0 0.0
    %182 = vmatprep.subr.mxu0 0.0
    %183 = vmatpush1.msra.mxu0 0.0
    %184 = vmatprep.subr.mxu0 0.0
    %185 = vmatpush1.msra.mxu0 0.0
    %186 = vmatprep.subr.mxu0 0.0
    %187 = vmatpush1.msra.mxu0 0.0
    %188 = vmatprep.subr.mxu0 0.0
    %189 = vmatpush1.msra.mxu0 0.0
    %190 = vmatprep.subr.mxu0 0.0
    %191 = vmatpush1.msra.mxu0 0.0
    %192 = vmatprep.subr.mxu0 0.0
    %193 = vmatpush1.msra.mxu0 0.0
    %194 = vmatprep.subr.mxu0 0.0
    %195 = vmatpush1.msra.mxu0 0.0
    %196 = vmatprep.subr.mxu0 0.0
    %197 = vmatpush1.msra.mxu0 0.0
    %198 = vmatprep.subr.mxu0 0.0
    %199 = vmatpush1.msra.mxu0 0.0
    %200 = vmatprep.subr.mxu0 0.0
    %201 = vmatpush1.msra.mxu0 0.0
    %202 = vmatprep.subr.mxu0 0.0
    %203 = vmatpush1.msra.mxu0 0.0
    %204 = vmatprep.subr.mxu0 0.0
    %205 = vmatpush1.msra.mxu0 0.0
    %206 = vmatprep.subr.mxu0 0.0
    %207 = vmatpush1.msra.mxu0 0.0
    %208 = vmatprep.subr.mxu0 0.0
    %209 = vmatpush1.msra.mxu0 0.0
    %210 = vmatprep.subr.mxu0 0.0
    %211 = vmatpush1.msra.mxu0 0.0
    %212 = vmatprep.subr.mxu0 0.0
    %213 = vmatpush1.msra.mxu0 0.0
    %214 = vmatprep.subr.mxu0 0.0
    %215 = vmatpush1.msra.mxu0 0.0
    %216 = vmatprep.subr.mxu0 0.0
    %217 = vmatpush1.msra.mxu0 0.0
    %218 = vmatprep.subr.mxu0 0.0
    %219 = vmatpush1.msra.mxu0 0.0
    %220 = vmatprep.subr.mxu0 0.0
    %221 = vmatpush1.msra.mxu0 0.0
    %222 = vmatprep.subr.mxu0 0.0
    %223 = vmatpush1.msra.mxu0 0.0
    %224 = vmatprep.subr.mxu0 0.0
    %225 = vmatpush1.msra.mxu0 0.0
    %226 = vmatprep.subr.mxu0 0.0
    %227 = vmatpush1.msra.mxu0 0.0
    %228 = vmatprep.subr.mxu0 0.0
    %229 = vmatpush1.msra.mxu0 0.0
    %230 = vmatprep.mubr.f32.mxu0 0.0
    %231 = vmatmul.mubr.f32.gmra.mrb[0].mxu0 %v155
    %v232 = vpop.f32.mrb[0].mxu0
    %v233 = vadd.f32 %v153, %v232
    %v234 = vpop.f32.mrb[0].mxu0
    %235 = vmatprep.mubr.f32.mxu0 0.0
    %236 = vmatmul.mubr.f32.gmra.mrb[0].mxu0 %v158
    %v237 = vpop.f32.mrb[0].mxu0
    %v238 = vadd.f32 %v153, %v237
    %v239 = vpop.f32.mrb[0].mxu0
    %240 = vmatprep.mubr.f32.mxu0 0.0
    %241 = vmatmul.mubr.f32.gmra.mrb[0].mxu0 %v161
    %v242 = vpop.f32.mrb[0].mxu0
    %v243 = vadd.f32 %v153, %v242
    %v244 = vpop.f32.mrb[0].mxu0
    %245 = vmatprep.mubr.f32.mxu0 0.0
    %246 = vmatmul.mubr.f32.gmra.mrb[0].mxu0 %v164
    %v247 = vpop.f32.mrb[0].mxu0
    %v248 = vadd.f32 %v153, %v247
    %v249 = vpop.f32.mrb[0].mxu0
    %250 = vdwg.mxu0
    %v251 = vxor.u32 %v233, 2147483648
    %v252 = vxor.u32 %v238, 2147483648
    %v253 = vxor.u32 %v243, 2147483648
    %v254 = vxor.u32 %v248, 2147483648
    %v255 = vmul.f32 %v251, 1.442695
    %v256 = vpow.pop %v255
    %v257 = vmul.f32 %v252, 1.442695
    %v258 = vpow.pop %v257
    %v259 = vmul.f32 %v253, 1.442695
    %v260 = vpow.pop %v259
    %v261 = vmul.f32 %v254, 1.442695
    %v262 = vpow.pop %v261
    %v263 = vadd.f32 %v256, 1.0
    %v264 = vadd.f32 %v258, 1.0
    %v265 = vadd.f32 %v260, 1.0
    %v266 = vadd.f32 %v262, 1.0
    %v267 = vrcp.pop %v263
    %v268 = vmul.f32 1.0, %v267
    %v269 = vrcp.pop %v264
    %v270 = vmul.f32 1.0, %v269
    %v271 = vrcp.pop %v265
    %v272 = vmul.f32 1.0, %v271
    %v273 = vrcp.pop %v266
    %v274 = vmul.f32 1.0, %v273
    %279 = vrot.lane.b32.xlu0 %v268, 96
    %v280 = vpop.permute.xlu0 %279
    %281 = vrot.lane.b32.xlu0 %v270, 96
    %v282 = vpop.permute.xlu0 %281
    %283 = vrot.lane.b32.xlu0 %v272, 96
    %v284 = vpop.permute.xlu0 %283
    %285 = vrot.lane.b32.xlu0 %v274, 96
    %v286 = vpop.permute.xlu0 %285
    %v291 = vmul.f32 %v233, %v280
    %v292 = vmul.f32 %v238, %v282
    %v293 = vmul.f32 %v243, %v284
    %v294 = vmul.f32 %v248, %v286
    %295 = vst.msk [vmem:[#allocation2] sm:$0xff] %vm92, 0.0
    %296 = vst.msk [vmem:[#allocation2 + $0x8] sm:$0xff] %vm92, 0.0
    %297 = vst.msk [vmem:[#allocation2 + $0x10] sm:$0xff] %vm92, 0.0
    %298 = vst.msk [vmem:[#allocation2 + $0x18] sm:$0xff] %vm92, 0.0
    %299 = vst.msk [vmem:[#allocation2 + $0x40] sm:$0xff] %vm92, 0.0
    %300 = vst.msk [vmem:[#allocation2 + $0x48] sm:$0xff] %vm92, 0.0
    %301 = vst.msk [vmem:[#allocation2 + $0x50] sm:$0xff] %vm92, 0.0
    %302 = vst.msk [vmem:[#allocation2 + $0x58] sm:$0xff] %vm92, 0.0
    %303 = vst.msk [vmem:[#allocation2 + $0x20] sm:$0xff] %vm92, %v291
    %304 = vst.msk [vmem:[#allocation2 + $0x28] sm:$0xff] %vm92, %v292
    %305 = vst.msk [vmem:[#allocation2 + $0x30] sm:$0xff] %vm92, %v293
    %306 = vst.msk [vmem:[#allocation2 + $0x38] sm:$0xff] %vm92, %v294
    %v307 = vld [vmem:[#allocation11] sm:$0xff]
    %v308 = vld [vmem:[#allocation11 + $0x8] sm:$0xff]
    %v309 = vld [vmem:[#allocation11 + $0x10] sm:$0xff]
    %v310 = vld [vmem:[#allocation11 + $0x18] sm:$0xff]
    %v311 = vld [vmem:[#allocation2 + $0x2] sm:$0xff]
    %v312 = vld [vmem:[#allocation2 + $0xa] sm:$0xff]
    %v313 = vld [vmem:[#allocation2 + $0x12] sm:$0xff]
    %v314 = vld [vmem:[#allocation2 + $0x1a] sm:$0xff]
    %v315 = vlaneseq
    %v316 = vshrl.u32 %v315, 7
    %v317 = vsub.s32 0, %v316
    %v318 = vrot.slane %v307, %v317
    %v319 = vmul.f32 %v311, %v318
    %v320 = vmul.f32 %v312, %v318
    %v321 = vmul.f32 %v313, %v318
    %v322 = vmul.f32 %v314, %v318
    %v323 = vadd.f32 %v319, 0.0
    %v324 = vadd.f32 %v320, 0.0
    %v325 = vadd.f32 %v321, 0.0
    %v326 = vadd.f32 %v322, 0.0
    %v327 = vld [vmem:[#allocation2 + $0x4] sm:$0xff]
    %v328 = vld [vmem:[#allocation2 + $0xc] sm:$0xff]
    %v329 = vld [vmem:[#allocation2 + $0x14] sm:$0xff]
    %v330 = vld [vmem:[#allocation2 + $0x1c] sm:$0xff]
    %v331 = vlaneseq
    %v332 = vshrl.u32 %v331, 7
    %v333 = vsub.s32 1, %v332
    %v334 = vrot.slane %v307, %v333
    %v335 = vmul.f32 %v327, %v334
    %v336 = vmul.f32 %v328, %v334
    %v337 = vmul.f32 %v329, %v334
    %v338 = vmul.f32 %v330, %v334
    %v339 = vadd.f32 %v323, %v335
    %v340 = vadd.f32 %v324, %v336
    %v341 = vadd.f32 %v325, %v337
    %v342 = vadd.f32 %v326, %v338
    %v343 = vld [vmem:[#allocation2 + $0x6] sm:$0xff]
    %v344 = vld [vmem:[#allocation2 + $0xe] sm:$0xff]
    %v345 = vld [vmem:[#allocation2 + $0x16] sm:$0xff]
    %v346 = vld [vmem:[#allocation2 + $0x1e] sm:$0xff]
    %v347 = vlaneseq
    %v348 = vshrl.u32 %v347, 7
    %v349 = vsub.s32 2, %v348
    %v350 = vrot.slane %v307, %v349
    %v351 = vmul.f32 %v343, %v350
    %v352 = vmul.f32 %v344, %v350
    %v353 = vmul.f32 %v345, %v350
    %v354 = vmul.f32 %v346, %v350
    %v355 = vadd.f32 %v339, %v351
    %v356 = vadd.f32 %v340, %v352
    %v357 = vadd.f32 %v341, %v353
    %v358 = vadd.f32 %v342, %v354
    %v359 = vld [vmem:[#allocation2 + $0x8] sm:$0xff]
    %v360 = vld [vmem:[#allocation2 + $0x10] sm:$0xff]
    %v361 = vld [vmem:[#allocation2 + $0x18] sm:$0xff]
    %v362 = vld [vmem:[#allocation2 + $0x20] sm:$0xff]
    %v363 = vlaneseq
    %v364 = vshrl.u32 %v363, 7
    %v365 = vsub.s32 3, %v364
    %v366 = vrot.slane %v307, %v365
    %v367 = vmul.f32 %v359, %v366
    %v368 = vmul.f32 %v360, %v366
    %v369 = vmul.f32 %v361, %v366
    %v370 = vmul.f32 %v362, %v366
    %v371 = vadd.f32 %v355, %v367
    %v372 = vadd.f32 %v356, %v368
    %v373 = vadd.f32 %v357, %v369
    %v374 = vadd.f32 %v358, %v370
    %v375 = vld [vmem:[#allocation2 + $0x22] sm:$0xff]
    %v376 = vlaneseq
    %v377 = vshrl.u32 %v376, 7
    %v378 = vsub.s32 4, %v377
    %v379 = vrot.slane %v307, %v378
    %v380 = vmul.f32 %v312, %v379
    %v381 = vmul.f32 %v313, %v379
    %v382 = vmul.f32 %v314, %v379
    %v383 = vmul.f32 %v375, %v379
    %v384 = vadd.f32 %v371, %v380
    %v385 = vadd.f32 %v372, %v381
    %v386 = vadd.f32 %v373, %v382
    %v387 = vadd.f32 %v374, %v383
    %v388 = vld [vmem:[#allocation2 + $0x24] sm:$0xff]
    %v389 = vlaneseq
    %v390 = vshrl.u32 %v389, 7
    %v391 = vsub.s32 5, %v390
    %v392 = vrot.slane %v307, %v391
    %v393 = vmul.f32 %v328, %v392
    %v394 = vmul.f32 %v329, %v392
    %v395 = vmul.f32 %v330, %v392
    %v396 = vmul.f32 %v388, %v392
    %v397 = vadd.f32 %v384, %v393
    %v398 = vadd.f32 %v385, %v394
    %v399 = vadd.f32 %v386, %v395
    %v400 = vadd.f32 %v387, %v396
    %v401 = vld [vmem:[#allocation2 + $0x26] sm:$0xff]
    %v402 = vlaneseq
    %v403 = vshrl.u32 %v402, 7
    %v404 = vsub.s32 6, %v403
    %v405 = vrot.slane %v307, %v404
    %v406 = vmul.f32 %v344, %v405
    %v407 = vmul.f32 %v345, %v405
    %v408 = vmul.f32 %v346, %v405
    %v409 = vmul.f32 %v401, %v405
    %v410 = vadd.f32 %v397, %v406
    %v411 = vadd.f32 %v398, %v407
    %v412 = vadd.f32 %v399, %v408
    %v413 = vadd.f32 %v400, %v409
    %v414 = vld [vmem:[#allocation2 + $0x28] sm:$0xff]
    %v415 = vlaneseq
    %v416 = vshrl.u32 %v415, 7
    %v417 = vsub.s32 7, %v416
    %v418 = vrot.slane %v307, %v417
    %v419 = vmul.f32 %v360, %v418
    %v420 = vmul.f32 %v361, %v418
    %v421 = vmul.f32 %v362, %v418
    %v422 = vmul.f32 %v414, %v418
    %v423 = vadd.f32 %v410, %v419
    %v424 = vadd.f32 %v411, %v420
    %v425 = vadd.f32 %v412, %v421
    %v426 = vadd.f32 %v413, %v422
    %v427 = vld [vmem:[#allocation2 + $0x2a] sm:$0xff]
    %v428 = vlaneseq
    %v429 = vshrl.u32 %v428, 7
    %v430 = vsub.s32 0, %v429
    %v431 = vrot.slane %v308, %v430
    %v432 = vmul.f32 %v313, %v431
    %v433 = vmul.f32 %v314, %v431
    %v434 = vmul.f32 %v375, %v431
    %v435 = vmul.f32 %v427, %v431
    %v436 = vadd.f32 %v423, %v432
    %v437 = vadd.f32 %v424, %v433
    %v438 = vadd.f32 %v425, %v434
    %v439 = vadd.f32 %v426, %v435
    %v440 = vld [vmem:[#allocation2 + $0x2c] sm:$0xff]
    %v441 = vlaneseq
    %v442 = vshrl.u32 %v441, 7
    %v443 = vsub.s32 1, %v442
    %v444 = vrot.slane %v308, %v443
    %v445 = vmul.f32 %v329, %v444
    %v446 = vmul.f32 %v330, %v444
    %v447 = vmul.f32 %v388, %v444
    %v448 = vmul.f32 %v440, %v444
    %v449 = vadd.f32 %v436, %v445
    %v450 = vadd.f32 %v437, %v446
    %v451 = vadd.f32 %v438, %v447
    %v452 = vadd.f32 %v439, %v448
    %v453 = vld [vmem:[#allocation2 + $0x2e] sm:$0xff]
    %v454 = vlaneseq
    %v455 = vshrl.u32 %v454, 7
    %v456 = vsub.s32 2, %v455
    %v457 = vrot.slane %v308, %v456
    %v458 = vmul.f32 %v345, %v457
    %v459 = vmul.f32 %v346, %v457
    %v460 = vmul.f32 %v401, %v457
    %v461 = vmul.f32 %v453, %v457
    %v462 = vadd.f32 %v449, %v458
    %v463 = vadd.f32 %v450, %v459
    %v464 = vadd.f32 %v451, %v460
    %v465 = vadd.f32 %v452, %v461
    %v466 = vld [vmem:[#allocation2 + $0x30] sm:$0xff]
    %v467 = vlaneseq
    %v468 = vshrl.u32 %v467, 7
    %v469 = vsub.s32 3, %v468
    %v470 = vrot.slane %v308, %v469
    %v471 = vmul.f32 %v361, %v470
    %v472 = vmul.f32 %v362, %v470
    %v473 = vmul.f32 %v414, %v470
    %v474 = vmul.f32 %v466, %v470
    %v475 = vadd.f32 %v462, %v471
    %v476 = vadd.f32 %v463, %v472
    %v477 = vadd.f32 %v464, %v473
    %v478 = vadd.f32 %v465, %v474
    %v479 = vld [vmem:[#allocation2 + $0x32] sm:$0xff]
    %v480 = vlaneseq
    %v481 = vshrl.u32 %v480, 7
    %v482 = vsub.s32 4, %v481
    %v483 = vrot.slane %v308, %v482
    %v484 = vmul.f32 %v314, %v483
    %v485 = vmul.f32 %v375, %v483
    %v486 = vmul.f32 %v427, %v483
    %v487 = vmul.f32 %v479, %v483
    %v488 = vadd.f32 %v475, %v484
    %v489 = vadd.f32 %v476, %v485
    %v490 = vadd.f32 %v477, %v486
    %v491 = vadd.f32 %v478, %v487
    %v492 = vld [vmem:[#allocation2 + $0x34] sm:$0xff]
    %v493 = vlaneseq
    %v494 = vshrl.u32 %v493, 7
    %v495 = vsub.s32 5, %v494
    %v496 = vrot.slane %v308, %v495
    %v497 = vmul.f32 %v330, %v496
    %v498 = vmul.f32 %v388, %v496
    %v499 = vmul.f32 %v440, %v496
    %v500 = vmul.f32 %v492, %v496
    %v501 = vadd.f32 %v488, %v497
    %v502 = vadd.f32 %v489, %v498
    %v503 = vadd.f32 %v490, %v499
    %v504 = vadd.f32 %v491, %v500
    %v505 = vld [vmem:[#allocation2 + $0x36] sm:$0xff]
    %v506 = vlaneseq
    %v507 = vshrl.u32 %v506, 7
    %v508 = vsub.s32 6, %v507
    %v509 = vrot.slane %v308, %v508
    %v510 = vmul.f32 %v346, %v509
    %v511 = vmul.f32 %v401, %v509
    %v512 = vmul.f32 %v453, %v509
    %v513 = vmul.f32 %v505, %v509
    %v514 = vadd.f32 %v501, %v510
    %v515 = vadd.f32 %v502, %v511
    %v516 = vadd.f32 %v503, %v512
    %v517 = vadd.f32 %v504, %v513
    %v518 = vld [vmem:[#allocation2 + $0x38] sm:$0xff]
    %v519 = vlaneseq
    %v520 = vshrl.u32 %v519, 7
    %v521 = vsub.s32 7, %v520
    %v522 = vrot.slane %v308, %v521
    %v523 = vmul.f32 %v362, %v522
    %v524 = vmul.f32 %v414, %v522
    %v525 = vmul.f32 %v466, %v522
    %v526 = vmul.f32 %v518, %v522
    %v527 = vadd.f32 %v514, %v523
    %v528 = vadd.f32 %v515, %v524
    %v529 = vadd.f32 %v516, %v525
    %v530 = vadd.f32 %v517, %v526
    %v531 = vld [vmem:[#allocation2 + $0x3a] sm:$0xff]
    %v532 = vlaneseq
    %v533 = vshrl.u32 %v532, 7
    %v534 = vsub.s32 0, %v533
    %v535 = vrot.slane %v309, %v534
    %v536 = vmul.f32 %v375, %v535
    %v537 = vmul.f32 %v427, %v535
    %v538 = vmul.f32 %v479, %v535
    %v539 = vmul.f32 %v531, %v535
    %v540 = vadd.f32 %v527, %v536
    %v541 = vadd.f32 %v528, %v537
    %v542 = vadd.f32 %v529, %v538
    %v543 = vadd.f32 %v530, %v539
    %v544 = vld [vmem:[#allocation2 + $0x3c] sm:$0xff]
    %v545 = vlaneseq
    %v546 = vshrl.u32 %v545, 7
    %v547 = vsub.s32 1, %v546
    %v548 = vrot.slane %v309, %v547
    %v549 = vmul.f32 %v388, %v548
    %v550 = vmul.f32 %v440, %v548
    %v551 = vmul.f32 %v492, %v548
    %v552 = vmul.f32 %v544, %v548
    %v553 = vadd.f32 %v540, %v549
    %v554 = vadd.f32 %v541, %v550
    %v555 = vadd.f32 %v542, %v551
    %v556 = vadd.f32 %v543, %v552
    %v557 = vld [vmem:[#allocation2 + $0x3e] sm:$0xff]
    %v558 = vlaneseq
    %v559 = vshrl.u32 %v558, 7
    %v560 = vsub.s32 2, %v559
    %v561 = vrot.slane %v309, %v560
    %v562 = vmul.f32 %v401, %v561
    %v563 = vmul.f32 %v453, %v561
    %v564 = vmul.f32 %v505, %v561
    %v565 = vmul.f32 %v557, %v561
    %v566 = vadd.f32 %v553, %v562
    %v567 = vadd.f32 %v554, %v563
    %v568 = vadd.f32 %v555, %v564
    %v569 = vadd.f32 %v556, %v565
    %v570 = vld [vmem:[#allocation2 + $0x40] sm:$0xff]
    %v571 = vlaneseq
    %v572 = vshrl.u32 %v571, 7
    %v573 = vsub.s32 3, %v572
    %v574 = vrot.slane %v309, %v573
    %v575 = vmul.f32 %v414, %v574
    %v576 = vmul.f32 %v466, %v574
    %v577 = vmul.f32 %v518, %v574
    %v578 = vmul.f32 %v570, %v574
    %v579 = vadd.f32 %v566, %v575
    %v580 = vadd.f32 %v567, %v576
    %v581 = vadd.f32 %v568, %v577
    %v582 = vadd.f32 %v569, %v578
    %v583 = vld [vmem:[#allocation2 + $0x42] sm:$0xff]
    %v584 = vlaneseq
    %v585 = vshrl.u32 %v584, 7
    %v586 = vsub.s32 4, %v585
    %v587 = vrot.slane %v309, %v586
    %v588 = vmul.f32 %v427, %v587
    %v589 = vmul.f32 %v479, %v587
    %v590 = vmul.f32 %v531, %v587
    %v591 = vmul.f32 %v583, %v587
    %v592 = vadd.f32 %v579, %v588
    %v593 = vadd.f32 %v580, %v589
    %v594 = vadd.f32 %v581, %v590
    %v595 = vadd.f32 %v582, %v591
    %v596 = vld [vmem:[#allocation2 + $0x44] sm:$0xff]
    %v597 = vlaneseq
    %v598 = vshrl.u32 %v597, 7
    %v599 = vsub.s32 5, %v598
    %v600 = vrot.slane %v309, %v599
    %v601 = vmul.f32 %v440, %v600
    %v602 = vmul.f32 %v492, %v600
    %v603 = vmul.f32 %v544, %v600
    %v604 = vmul.f32 %v596, %v600
    %v605 = vadd.f32 %v592, %v601
    %v606 = vadd.f32 %v593, %v602
    %v607 = vadd.f32 %v594, %v603
    %v608 = vadd.f32 %v595, %v604
    %v609 = vld [vmem:[#allocation2 + $0x46] sm:$0xff]
    %v610 = vlaneseq
    %v611 = vshrl.u32 %v610, 7
    %v612 = vsub.s32 6, %v611
    %v613 = vrot.slane %v309, %v612
    %v614 = vmul.f32 %v453, %v613
    %v615 = vmul.f32 %v505, %v613
    %v616 = vmul.f32 %v557, %v613
    %v617 = vmul.f32 %v609, %v613
    %v618 = vadd.f32 %v605, %v614
    %v619 = vadd.f32 %v606, %v615
    %v620 = vadd.f32 %v607, %v616
    %v621 = vadd.f32 %v608, %v617
    %v622 = vld [vmem:[#allocation2 + $0x48] sm:$0xff]
    %v623 = vlaneseq
    %v624 = vshrl.u32 %v623, 7
    %v625 = vsub.s32 7, %v624
    %v626 = vrot.slane %v309, %v625
    %v627 = vmul.f32 %v466, %v626
    %v628 = vmul.f32 %v518, %v626
    %v629 = vmul.f32 %v570, %v626
    %v630 = vmul.f32 %v622, %v626
    %v631 = vadd.f32 %v618, %v627
    %v632 = vadd.f32 %v619, %v628
    %v633 = vadd.f32 %v620, %v629
    %v634 = vadd.f32 %v621, %v630
    %v635 = vld [vmem:[#allocation2 + $0x4a] sm:$0xff]
    %v636 = vlaneseq
    %v637 = vshrl.u32 %v636, 7
    %v638 = vsub.s32 0, %v637
    %v639 = vrot.slane %v310, %v638
    %v640 = vmul.f32 %v479, %v639
    %v641 = vmul.f32 %v531, %v639
    %v642 = vmul.f32 %v583, %v639
    %v643 = vmul.f32 %v635, %v639
    %v644 = vadd.f32 %v631, %v640
    %v645 = vadd.f32 %v632, %v641
    %v646 = vadd.f32 %v633, %v642
    %v647 = vadd.f32 %v634, %v643
    %v648 = vld [vmem:[#allocation2 + $0x4c] sm:$0xff]
    %v649 = vlaneseq
    %v650 = vshrl.u32 %v649, 7
    %v651 = vsub.s32 1, %v650
    %v652 = vrot.slane %v310, %v651
    %v653 = vmul.f32 %v492, %v652
    %v654 = vmul.f32 %v544, %v652
    %v655 = vmul.f32 %v596, %v652
    %v656 = vmul.f32 %v648, %v652
    %v657 = vadd.f32 %v644, %v653
    %v658 = vadd.f32 %v645, %v654
    %v659 = vadd.f32 %v646, %v655
    %v660 = vadd.f32 %v647, %v656
    %v661 = vld [vmem:[#allocation2 + $0x4e] sm:$0xff]
    %v662 = vlaneseq
    %v663 = vshrl.u32 %v662, 7
    %v664 = vsub.s32 2, %v663
    %v665 = vrot.slane %v310, %v664
    %v666 = vmul.f32 %v505, %v665
    %v667 = vmul.f32 %v557, %v665
    %v668 = vmul.f32 %v609, %v665
    %v669 = vmul.f32 %v661, %v665
    %v670 = vadd.f32 %v657, %v666
    %v671 = vadd.f32 %v658, %v667
    %v672 = vadd.f32 %v659, %v668
    %v673 = vadd.f32 %v660, %v669
    %v674 = vld [vmem:[#allocation2 + $0x50] sm:$0xff]
    %v675 = vlaneseq
    %v676 = vshrl.u32 %v675, 7
    %v677 = vsub.s32 3, %v676
    %v678 = vrot.slane %v310, %v677
    %v679 = vmul.f32 %v518, %v678
    %v680 = vmul.f32 %v570, %v678
    %v681 = vmul.f32 %v622, %v678
    %v682 = vmul.f32 %v674, %v678
    %v683 = vadd.f32 %v670, %v679
    %v684 = vadd.f32 %v671, %v680
    %v685 = vadd.f32 %v672, %v681
    %v686 = vadd.f32 %v673, %v682
    %v687 = vld [vmem:[#allocation2 + $0x52] sm:$0xff]
    %v688 = vlaneseq
    %v689 = vshrl.u32 %v688, 7
    %v690 = vsub.s32 4, %v689
    %v691 = vrot.slane %v310, %v690
    %v692 = vmul.f32 %v531, %v691
    %v693 = vmul.f32 %v583, %v691
    %v694 = vmul.f32 %v635, %v691
    %v695 = vmul.f32 %v687, %v691
    %v696 = vadd.f32 %v683, %v692
    %v697 = vadd.f32 %v684, %v693
    %v698 = vadd.f32 %v685, %v694
    %v699 = vadd.f32 %v686, %v695
    %v700 = vld [vmem:[#allocation2 + $0x54] sm:$0xff]
    %v701 = vlaneseq
    %v702 = vshrl.u32 %v701, 7
    %v703 = vsub.s32 5, %v702
    %v704 = vrot.slane %v310, %v703
    %v705 = vmul.f32 %v544, %v704
    %v706 = vmul.f32 %v596, %v704
    %v707 = vmul.f32 %v648, %v704
    %v708 = vmul.f32 %v700, %v704
    %v709 = vadd.f32 %v696, %v705
    %v710 = vadd.f32 %v697, %v706
    %v711 = vadd.f32 %v698, %v707
    %v712 = vadd.f32 %v699, %v708
    %v713 = vld [vmem:[#allocation2 + $0x56] sm:$0xff]
    %v714 = vlaneseq
    %v715 = vshrl.u32 %v714, 7
    %v716 = vsub.s32 6, %v715
    %v717 = vrot.slane %v310, %v716
    %v718 = vmul.f32 %v557, %v717
    %v719 = vmul.f32 %v609, %v717
    %v720 = vmul.f32 %v661, %v717
    %v721 = vmul.f32 %v713, %v717
    %v722 = vadd.f32 %v709, %v718
    %v723 = vadd.f32 %v710, %v719
    %v724 = vadd.f32 %v711, %v720
    %v725 = vadd.f32 %v712, %v721
    %v726 = vlaneseq
    %v727 = vshrl.u32 %v726, 7
    %v728 = vsub.s32 1, %v727
    %v729 = vrot.slane %v91, %v728
    %v730 = vadd.f32 %v722, %v729
    %v731 = vadd.f32 %v723, %v729
    %v732 = vadd.f32 %v724, %v729
    %v733 = vadd.f32 %v725, %v729
    %v734 = vxor.u32 %v730, 2147483648
    %v735 = vxor.u32 %v731, 2147483648
    %v736 = vxor.u32 %v732, 2147483648
    %v737 = vxor.u32 %v733, 2147483648
    %v738 = vmul.f32 %v734, 1.442695
    %v739 = vpow.pop %v738
    %v740 = vmul.f32 %v735, 1.442695
    %v741 = vpow.pop %v740
    %v742 = vmul.f32 %v736, 1.442695
    %v743 = vpow.pop %v742
    %v744 = vmul.f32 %v737, 1.442695
    %v745 = vpow.pop %v744
    %v746 = vadd.f32 %v739, 1.0
    %v747 = vadd.f32 %v741, 1.0
    %v748 = vadd.f32 %v743, 1.0
    %v749 = vadd.f32 %v745, 1.0
    %v750 = vrcp.pop %v746
    %v751 = vmul.f32 1.0, %v750
    %v752 = vrcp.pop %v747
    %v753 = vmul.f32 1.0, %v752
    %v754 = vrcp.pop %v748
    %v755 = vmul.f32 1.0, %v754
    %v756 = vrcp.pop %v749
    %v757 = vmul.f32 1.0, %v756
    %v758 = vmul.f32 %v730, %v751
    %v759 = vmul.f32 %v731, %v753
    %v760 = vmul.f32 %v732, %v755
    %v761 = vmul.f32 %v733, %v757
    %v762 = vld [vmem:[#allocation9] sm:$0xff]
    %v763 = vld [vmem:[#allocation9 + $0x8] sm:$0xff]
    %v764 = vld [vmem:[#allocation9 + $0x10] sm:$0xff]
    %v765 = vld [vmem:[#allocation9 + $0x18] sm:$0xff]
    %767 = vrot.lane.b32.xlu0 %v729, 96
    %v768 = vpop.permute.xlu0 %767
    %v771 = vsel %vm92, %v758, 0
    %v774 = vsel %vm92, %v759, 0
    %v777 = vsel %vm92, %v760, 0
    %v780 = vsel %vm92, %v761, 0
    %782 = vmatprep.subr.mxu0 0.0
    %783 = vmatpush1.msra.mxu0 %v762
    %784 = vmatprep.subr.mxu0 0.0
    %785 = vmatpush1.msra.mxu0 %v763
    %786 = vmatprep.subr.mxu0 0.0
    %787 = vmatpush1.msra.mxu0 %v764
    %788 = vmatprep.subr.mxu0 0.0
    %789 = vmatpush1.msra.mxu0 %v765
    %790 = vmatprep.subr.mxu0 0.0
    %791 = vmatpush1.msra.mxu0 0.0
    %792 = vmatprep.subr.mxu0 0.0
    %793 = vmatpush1.msra.mxu0 0.0
    %794 = vmatprep.subr.mxu0 0.0
    %795 = vmatpush1.msra.mxu0 0.0
    %796 = vmatprep.subr.mxu0 0.0
    %797 = vmatpush1.msra.mxu0 0.0
    %798 = vmatprep.subr.mxu0 0.0
    %799 = vmatpush1.msra.mxu0 0.0
    %800 = vmatprep.subr.mxu0 0.0
    %801 = vmatpush1.msra.mxu0 0.0
    %802 = vmatprep.subr.mxu0 0.0
    %803 = vmatpush1.msra.mxu0 0.0
    %804 = vmatprep.subr.mxu0 0.0
    %805 = vmatpush1.msra.mxu0 0.0
    %806 = vmatprep.subr.mxu0 0.0
    %807 = vmatpush1.msra.mxu0 0.0
    %808 = vmatprep.subr.mxu0 0.0
    %809 = vmatpush1.msra.mxu0 0.0
    %810 = vmatprep.subr.mxu0 0.0
    %811 = vmatpush1.msra.mxu0 0.0
    %812 = vmatprep.subr.mxu0 0.0
    %813 = vmatpush1.msra.mxu0 0.0
    %814 = vmatprep.subr.mxu0 0.0
    %815 = vmatpush1.msra.mxu0 0.0
    %816 = vmatprep.subr.mxu0 0.0
    %817 = vmatpush1.msra.mxu0 0.0
    %818 = vmatprep.subr.mxu0 0.0
    %819 = vmatpush1.msra.mxu0 0.0
    %820 = vmatprep.subr.mxu0 0.0
    %821 = vmatpush1.msra.mxu0 0.0
    %822 = vmatprep.subr.mxu0 0.0
    %823 = vmatpush1.msra.mxu0 0.0
    %824 = vmatprep.subr.mxu0 0.0
    %825 = vmatpush1.msra.mxu0 0.0
    %826 = vmatprep.subr.mxu0 0.0
    %827 = vmatpush1.msra.mxu0 0.0
    %828 = vmatprep.subr.mxu0 0.0
    %829 = vmatpush1.msra.mxu0 0.0
    %830 = vmatprep.subr.mxu0 0.0
    %831 = vmatpush1.msra.mxu0 0.0
    %832 = vmatprep.subr.mxu0 0.0
    %833 = vmatpush1.msra.mxu0 0.0
    %834 = vmatprep.subr.mxu0 0.0
    %835 = vmatpush1.msra.mxu0 0.0
    %836 = vmatprep.subr.mxu0 0.0
    %837 = vmatpush1.msra.mxu0 0.0
    %838 = vmatprep.subr.mxu0 0.0
    %839 = vmatpush1.msra.mxu0 0.0
    %840 = vmatprep.subr.mxu0 0.0
    %841 = vmatpush1.msra.mxu0 0.0
    %842 = vmatprep.subr.mxu0 0.0
    %843 = vmatpush1.msra.mxu0 0.0
    %844 = vmatprep.subr.mxu0 0.0
    %845 = vmatpush1.msra.mxu0 0.0
    %846 = vmatprep.mubr.f32.mxu0 0.0
    %847 = vmatmul.mubr.f32.gmra.mrb[0].mxu0 %v771
    %v848 = vpop.f32.mrb[0].mxu0
    %v849 = vadd.f32 %v768, %v848
    %v850 = vpop.f32.mrb[0].mxu0
    %851 = vmatprep.mubr.f32.mxu0 0.0
    %852 = vmatmul.mubr.f32.gmra.mrb[0].mxu0 %v774
    %v853 = vpop.f32.mrb[0].mxu0
    %v854 = vadd.f32 %v768, %v853
    %v855 = vpop.f32.mrb[0].mxu0
    %856 = vmatprep.mubr.f32.mxu0 0.0
    %857 = vmatmul.mubr.f32.gmra.mrb[0].mxu0 %v777
    %v858 = vpop.f32.mrb[0].mxu0
    %v859 = vadd.f32 %v768, %v858
    %v860 = vpop.f32.mrb[0].mxu0
    %861 = vmatprep.mubr.f32.mxu0 0.0
    %862 = vmatmul.mubr.f32.gmra.mrb[0].mxu0 %v780
    %v863 = vpop.f32.mrb[0].mxu0
    %v864 = vadd.f32 %v768, %v863
    %v865 = vpop.f32.mrb[0].mxu0
    %866 = vdwg.mxu0
    %867 = vst.msk [vmem:[#allocation12] sm:$0xff] %vm92, %v849
    %868 = vst.msk [vmem:[#allocation12 + $0x8] sm:$0xff] %vm92, %v854
    %869 = vst.msk [vmem:[#allocation12 + $0x10] sm:$0xff] %vm92, %v859
    %870 = vst.msk [vmem:[#allocation12 + $0x18] sm:$0xff] %vm92, %v864
    // Predicated region
    $region42: #{conformer_conv_module.1} parent=1 // pred_check
      _
    $region43: #{conformer_conv_module.1} parent=1 // pred_check_branch
      %872 = sbr.rel (0) target = $region45
    $region44: #{conformer_conv_module.1} parent=1 // pred_region
      %s874 = ssub.s32 512, 512
      %875 = vsyncadd [#allocation5], %s874
      %s876 = sshll.u32 [#allocation12], 4
      %s877 = int_to_ptr.vmem [resolvable:$true] %s876
      %882 = dma.vmem_to_hbm [thread:$0]  %s877, 512, %s5, [#allocation5], 128, 128, 8
    $region45: #{conformer_conv_module.1} parent=1 // pred_fallthru
      _
    // Predicated region
    $region46: #{conformer_conv_module.1} parent=1 // pred_check
      _
    $region47: #{conformer_conv_module.1} parent=1 // pred_check_branch
      %884 = sbr.rel (0) target = $region49
    $region48: #{conformer_conv_module.1} parent=1 // pred_region
      %885 = dma.done [#allocation5], 512
    $region49: #{conformer_conv_module.1} parent=1 // pred_fallthru
      _
    %886 = vsyncpa [#allocation4], 1
    %887 = vsyncpa [#allocation7], 1
    %888 = vsyncpa [#allocation10], 1
    %889 = vsyncpa [#allocation5], 1

</llo_original>
